<compile_context>
chip_gen: v5e
topology: v5e:2x2
jax: 0.10.0
libtpu: 0.0.40
codegen_flags: <defaults>
</compile_context>

<pallas_src>
import jax
import jax.numpy as jnp
from jax.experimental import pallas as pl
from jax.experimental.pallas import tpu as pltpu


def _scorer_kernel(a_ref, b_ref, w1_ref, b1_ref, w2_ref, b2_ref, o_ref):
    # a_ref, b_ref : (TN, E)  f32   streamed row tiles
    # w1_ref       : (2E, H)  bf16  resident
    # b1_ref       : (1, H)   f32   resident
    # w2_ref       : (1, H)   f32   resident
    # b2_ref       : (1, 1)   f32   SMEM scalar
    # o_ref        : (1, TN)  f32   lane-dense output row
    #
    # Fused concat + first Linear as a single K=2E bf16 MXU dot
    # (f32 accumulation): cat([a, b], -1) @ W1.
    x = jnp.concatenate([a_ref[...], b_ref[...]], axis=-1).astype(jnp.bfloat16)
    h = jnp.dot(x, w1_ref[...], preferred_element_type=jnp.float32) + b1_ref[...]
    h = jnp.maximum(h, 0.0)                                   # ReLU (VPU, f32)
    # Second Linear (H -> 1) as a lane reduction; result is emitted as a
    # lane-dense (1, TN) row so the store is a wide unmasked vst and the MXU
    # stays free for the next tile's pushes.
    s = jnp.sum(h * w2_ref[...], axis=-1) + b2_ref[0, 0]      # (TN,)
    o_ref[...] = s[None, :].astype(o_ref.dtype)               # (1, TN)


def _round_up(x, m):
    return ((x + m - 1) // m) * m


def concat_scorer(a, b, w1, b1, w2, b2, *, tile_n=4096):
    """a, b: (N, E). w1: (2E, H), b1: (H,), w2: (H, 1), b2: (1,).  Returns (N,) f32."""
    assert a.shape == b.shape and a.ndim == 2
    N, E = a.shape
    twoE, H = w1.shape
    assert twoE == 2 * E
    assert b1.shape == (H,) and w2.shape == (H, 1) and b2.shape == (1,)

    # Resident operands: W1 fed to the MXU in bf16; biases / w2 row stay f32.
    w1_bf16 = w1.astype(jnp.bfloat16)          # (2E, H)
    b1_2d = b1.reshape(1, H).astype(jnp.float32)
    w2_row = w2.reshape(1, H).astype(jnp.float32)
    b2_2d = b2.reshape(1, 1).astype(jnp.float32)

    # Row tile: multiple of 8 sublanes; clamp so tiny batches use one block.
    tile_n = max(8, min(_round_up(int(tile_n), 8), _round_up(N, 8)))
    grid_n = pl.cdiv(N, tile_n)   # partial trailing block: tail rows are don't-care

    out = pl.pallas_call(
        _scorer_kernel,
        out_shape=jax.ShapeDtypeStruct((grid_n, tile_n), jnp.float32),
        grid=(grid_n,),
        in_specs=[
            pl.BlockSpec((tile_n, E), lambda i: (i, 0)),          # a rows (streamed)
            pl.BlockSpec((tile_n, E), lambda i: (i, 0)),          # b rows (streamed)
            pl.BlockSpec((twoE, H), lambda i: (0, 0)),            # W1 (resident, bf16)
            pl.BlockSpec((1, H), lambda i: (0, 0)),               # b1  (resident)
            pl.BlockSpec((1, H), lambda i: (0, 0)),               # w2 row (resident)
            pl.BlockSpec(memory_space=pltpu.MemorySpace.SMEM),    # b2 scalar
        ],
        out_specs=pl.BlockSpec((1, tile_n), lambda i: (i, 0)),    # lane-dense output
        compiler_params=pltpu.CompilerParams(
            dimension_semantics=("parallel",),          # pipelining + megacore sharding
            vmem_limit_bytes=48 * 1024 * 1024,          # > v5e 16 MiB default, < v7x 64 MiB/TC
        ),
    )(a, b, w1_bf16, b1_2d, w2_row, b2_2d)

    return out.reshape(-1)[:N]                                    # (N,) == squeeze(1)


def init_params(key, embed_dim, hidden_dim):
    """Deterministic init mirroring nn.Linear default (U[-1/sqrt(fan_in), ..])."""
    k1, k2, k3, k4 = jax.random.split(key, 4)
    fan1 = 2 * embed_dim
    fan2 = hidden_dim
    lim1 = 1.0 / jnp.sqrt(fan1)
    lim2 = 1.0 / jnp.sqrt(fan2)
    # Stored as (in_features, out_features) — i.e. PyTorch weight transposed.
    w1 = jax.random.uniform(k1, (fan1, hidden_dim), jnp.float32, -lim1, lim1)
    b1 = jax.random.uniform(k2, (hidden_dim,), jnp.float32, -lim1, lim1)
    w2 = jax.random.uniform(k3, (hidden_dim, 1), jnp.float32, -lim2, lim2)
    b2 = jax.random.uniform(k4, (1,), jnp.float32, -lim2, lim2)
    return w1, b1, w2, b2


if __name__ == "__main__":
    embed_dim = 32
    hidden_dim = 128

    key = jax.random.PRNGKey(0)
    kp, kd = jax.random.split(key)
    w1, b1, w2, b2 = init_params(kp, embed_dim, hidden_dim)

    def reference(a, b):
        x = jnp.concatenate([a, b], axis=1)
        return (jnp.maximum(x @ w1 + b1, 0.0) @ w2 + b2)[:, 0]

    # bf16 MXU operands => relaxed tolerance vs the f32 reference.
    ATOL = RTOL = 5e-2

    # Case 1: tiny batch (tile clamps to the batch; single block).
    ka, kb, kd = jax.random.split(kd, 3)
    a_small = jax.random.normal(ka, (8, embed_dim), jnp.float32)
    b_small = jax.random.normal(kb, (8, embed_dim), jnp.float32)
    s1 = jax.block_until_ready(concat_scorer(a_small, b_small, w1, b1, w2, b2))
    assert s1.shape == (8,)
    assert jnp.allclose(s1, reference(a_small, b_small), atol=ATOL, rtol=RTOL)

    # Case 2: N not a multiple of the tile (partial trailing block, multi-step grid).
    ka, kb, kd = jax.random.split(kd, 3)
    a_big = jax.random.normal(ka, (300, embed_dim), jnp.float32)
    b_big = jax.random.normal(kb, (300, embed_dim), jnp.float32)
    s2 = jax.block_until_ready(concat_scorer(a_big, b_big, w1, b1, w2, b2, tile_n=128))
    assert s2.shape == (300,)
    assert jnp.allclose(s2, reference(a_big, b_big), atol=ATOL, rtol=RTOL)

    print("KERNEL_OK")
</pallas_src>

<mosaic_0001>
module attributes {stable_mosaic.version = 11 : i64} {
  func.func @_scorer_kernel(%arg0: i32, %arg1: memref<8x32xf32, #tpu.memory_space<vmem>>, %arg2: memref<8x32xf32, #tpu.memory_space<vmem>>, %arg3: memref<64x128xbf16, #tpu.memory_space<vmem>>, %arg4: memref<1x128xf32, #tpu.memory_space<vmem>>, %arg5: memref<1x128xf32, #tpu.memory_space<vmem>>, %arg6: memref<1x1xf32, #tpu.memory_space<smem>>, %arg7: memref<1x8xf32, #tpu.memory_space<vmem>>) attributes {dimension_semantics = [#tpu.dimension_semantics<parallel>], iteration_bounds = array<i64: 1>, scalar_prefetch = 0 : i64, scratch_operands = 0 : i64, tpu.core_type = #tpu.core_type<tc>, window_params = [{transform_indices = @transform_0, window_bounds = array<i64: 8, 32>}, {transform_indices = @transform_1, window_bounds = array<i64: 8, 32>}, {pipeline_mode = #tpu.pipeline_mode<synchronous>, transform_indices = @transform_2, window_bounds = array<i64: 64, 128>}, {pipeline_mode = #tpu.pipeline_mode<synchronous>, transform_indices = @transform_3, window_bounds = array<i64: 1, 128>}, {pipeline_mode = #tpu.pipeline_mode<synchronous>, transform_indices = @transform_4, window_bounds = array<i64: 1, 128>}, {transform_indices = @transform_5, window_bounds = array<i64: 1, 1>}, {transform_indices = @transform_6, window_bounds = array<i64: 1, 8>}]} {
    %c0 = arith.constant 0 : index
    %c0_0 = arith.constant 0 : index
    %0 = vector.load %arg1[%c0, %c0_0] : memref<8x32xf32, #tpu.memory_space<vmem>>, vector<8x32xf32>
    %c0_1 = arith.constant 0 : index
    %c0_2 = arith.constant 0 : index
    %1 = vector.load %arg2[%c0_1, %c0_2] : memref<8x32xf32, #tpu.memory_space<vmem>>, vector<8x32xf32>
    %2 = tpu.concatenate %0, %1 in 1 : vector<8x32xf32>, vector<8x32xf32> -> vector<8x64xf32>
    %3 = arith.truncf %2 : vector<8x64xf32> to vector<8x64xbf16>
    %c0_3 = arith.constant 0 : index
    %c0_4 = arith.constant 0 : index
    %4 = vector.load %arg3[%c0_3, %c0_4] : memref<64x128xbf16, #tpu.memory_space<vmem>>, vector<64x128xbf16>
    %cst = arith.constant dense<0.000000e+00> : vector<8x128xf32>
    %5 = tpu.matmul %3, %4, %cst {dimension_numbers = #tpu.dot_dimension_numbers<[1], [0], [0], [1], [0, 0, 1, 1], [], []>} : vector<8x64xbf16>, vector<64x128xbf16>, vector<8x128xf32> -> vector<8x128xf32>
    %c0_5 = arith.constant 0 : index
    %c0_6 = arith.constant 0 : index
    %6 = vector.load %arg4[%c0_5, %c0_6] : memref<1x128xf32, #tpu.memory_space<vmem>>, vector<1x128xf32>
    %7 = vector.broadcast %6 : vector<1x128xf32> to vector<8x128xf32>
    %8 = arith.addf %5, %7 : vector<8x128xf32>
    %cst_7 = arith.constant 0.000000e+00 : f32
    %9 = vector.broadcast %cst_7 : f32 to vector<8x128xf32>
    %10 = arith.maximumf %8, %9 : vector<8x128xf32>
    %c0_8 = arith.constant 0 : index
    %c0_9 = arith.constant 0 : index
    %11 = vector.load %arg5[%c0_8, %c0_9] : memref<1x128xf32, #tpu.memory_space<vmem>>, vector<1x128xf32>
    %12 = vector.broadcast %11 : vector<1x128xf32> to vector<8x128xf32>
    %13 = arith.mulf %10, %12 : vector<8x128xf32>
    %cst_10 = arith.constant dense<0.000000e+00> : vector<8xf32>
    %14 = vector.multi_reduction <add>, %13, %cst_10 [1] : vector<8x128xf32> to vector<8xf32>
    %c0_11 = arith.constant 0 : index
    %c0_12 = arith.constant 0 : index
    %15 = memref.load %arg6[%c0_11, %c0_12] : memref<1x1xf32, #tpu.memory_space<smem>>
    %16 = vector.broadcast %15 : f32 to vector<8xf32>
    %17 = arith.addf %14, %16 : vector<8xf32>
    %18 = vector.shape_cast %17 : vector<8xf32> to vector<1x8xf32>
    %c0_13 = arith.constant 0 : index
    %c0_14 = arith.constant 0 : index
    %19 = vector.load %arg7[%c0_13, %c0_14] : memref<1x8xf32, #tpu.memory_space<vmem>>, vector<1x8xf32>
    tpu.vector_store %arg7[%c0_13, %c0_14], %18 {strides = array<i32>} : memref<1x8xf32, #tpu.memory_space<vmem>>, vector<1x8xf32>,
    return
  }
  func.func @transform_0(%arg0: i32) -> (i32, i32) {
    %c0_i32 = arith.constant 0 : i32
    %c0_i32_0 = arith.constant 0 : i32
    return %arg0, %c0_i32 : i32, i32
  }
  func.func @transform_1(%arg0: i32) -> (i32, i32) {
    %c0_i32 = arith.constant 0 : i32
    %c0_i32_0 = arith.constant 0 : i32
    return %arg0, %c0_i32 : i32, i32
  }
  func.func @transform_2(%arg0: i32) -> (i32, i32) {
    %c0_i32 = arith.constant 0 : i32
    %c0_i32_0 = arith.constant 0 : i32
    %c0_i32_1 = arith.constant 0 : i32
    return %c0_i32, %c0_i32_0 : i32, i32
  }
  func.func @transform_3(%arg0: i32) -> (i32, i32) {
    %c0_i32 = arith.constant 0 : i32
    %c0_i32_0 = arith.constant 0 : i32
    %c0_i32_1 = arith.constant 0 : i32
    return %c0_i32, %c0_i32_0 : i32, i32
  }
  func.func @transform_4(%arg0: i32) -> (i32, i32) {
    %c0_i32 = arith.constant 0 : i32
    %c0_i32_0 = arith.constant 0 : i32
    %c0_i32_1 = arith.constant 0 : i32
    return %c0_i32, %c0_i32_0 : i32, i32
  }
  func.func @transform_5(%arg0: i32) -> (i32, i32) {
    %c0_i32 = arith.constant 0 : i32
    %c0_i32_0 = arith.constant 0 : i32
    %c0_i32_1 = arith.constant 0 : i32
    return %c0_i32, %c0_i32_0 : i32, i32
  }
  func.func @transform_6(%arg0: i32) -> (i32, i32) {
    %c0_i32 = arith.constant 0 : i32
    %c0_i32_0 = arith.constant 0 : i32
    return %arg0, %c0_i32 : i32, i32
  }
}

</mosaic_0001>

<llo_original>
// kernel: tpu_custom_call.1
$region0: #{tpu_custom_call.1}
  #allocation0 [shape = 'u32[]', space=smem, size = 0x4, offset = 0x4, fixed_abs, tag = 'smem constant byte address 0x4 - core index']
  #allocation1 [shape = 'u32[72,128]{1,0:T(1,128)}', space=vmem, size = 0x9000, scoped, tag = 'internal scratch']
  #allocation2 [shape = 'f32[1,1]{1,0:T(1,128)S(6)}', space=smem, size = 0x200, scoped, tag = 'scoped memory for tpu_custom_call.1']
  %s0 = inlined_call_operand.hbm [shape: f32[8,32], index: 0, kind: input, shape index: {}]
  %s1 = inlined_call_operand.hbm [shape: f32[8,32], index: 1, kind: input, shape index: {}]
  %s2 = inlined_call_operand.hbm [shape: bf16[64,128], index: 2, kind: input, shape index: {}]
  %s3 = inlined_call_operand.vmem [shape: f32[1,128], index: 3, kind: input, shape index: {}]
  %s4 = inlined_call_operand.vmem [shape: f32[1,128], index: 4, kind: input, shape index: {}]
  %s5 = inlined_call_operand.<no memory space> [shape: f32[1,1], index: 5, kind: input, shape index: {}]
  %s6 = inlined_call_operand.hbm [shape: f32[1,8], index: 6, kind: output, shape index: {}]
  %s7 = sld [smem:[#allocation0]]
  $region46: #{tpu_custom_call.1} parent=0
    _
  %s9 = ssub.s32 1, %s7
  %s10 = scalar_select 0, %s9, %s7
  %11 = sst [smem:[#allocation2]] %s5
  $region1: #{tpu_custom_call.1} parent=0
    #allocation3 [shape = 'u8[4096]{0}', space=vmem, size = 0x1000, scoped, tag = 'input window, operand 0, single buffered']
    #allocation4 [shape = 's32[1]{0}', space=sflag, size = 0x4, scoped, tag = 'scoped memory for tpu_custom_call.1']
    #allocation5 [shape = 's32[1]{0}', space=sflag, size = 0x4, scoped, tag = 'scoped memory for tpu_custom_call.1']
    #allocation6 [shape = 'u8[4096]{0}', space=vmem, size = 0x1000, scoped, tag = 'input window, operand 1, single buffered']
    #allocation7 [shape = 's32[1]{0}', space=sflag, size = 0x4, scoped, tag = 'scoped memory for tpu_custom_call.1']
    #allocation8 [shape = 'u8[16384]{0}', space=vmem, size = 0x4000, scoped, tag = 'input window, operand 2, single buffered']
    #allocation9 [shape = 'u8[512]{0}', space=vmem, size = 0x400, scoped, tag = 'output window, operand 0, single buffered']
    %12 = vsyncpa [#allocation4], 0
    %13 = vsyncpa [#allocation7], 0
    %14 = vsyncpa [#allocation5], 0
    // Predicated region
    $region2: #{tpu_custom_call.1} parent=1 // pred_check
      _
    $region3: #{tpu_custom_call.1} parent=1 // pred_check_branch
      %16 = sbr.rel (0) target = $region5
    $region4: #{tpu_custom_call.1} parent=1 // pred_region
      %18 = vsyncadd [#allocation4], 0
      %s20 = sshll.u32 %s0, 4
      %s21 = int_to_ptr.hbm [resolvable:$true] %s20
      %s22 = sshll.u32 [#allocation3], 4
      %s23 = int_to_ptr.vmem [resolvable:$true] %s22
      %25 = dma.hbm_to_vmem [thread:$0]  %s21, 128, %s23, [#allocation4]
    $region5: #{tpu_custom_call.1} parent=1 // pred_fallthru
      _
    // Predicated region
    $region6: #{tpu_custom_call.1} parent=1 // pred_check
      _
    $region7: #{tpu_custom_call.1} parent=1 // pred_check_branch
      %27 = sbr.rel (0) target = $region9
    $region8: #{tpu_custom_call.1} parent=1 // pred_region
      %29 = vsyncadd [#allocation7], 0
      %s31 = sshll.u32 %s1, 4
      %s32 = int_to_ptr.hbm [resolvable:$true] %s31
      %s33 = sshll.u32 [#allocation6], 4
      %s34 = int_to_ptr.vmem [resolvable:$true] %s33
      %36 = dma.hbm_to_vmem [thread:$0]  %s32, 128, %s34, [#allocation7]
    $region9: #{tpu_custom_call.1} parent=1 // pred_fallthru
      _
    // Predicated region
    $region10: #{tpu_custom_call.1} parent=1 // pred_check
      _
    $region11: #{tpu_custom_call.1} parent=1 // pred_check_branch
      %38 = sbr.rel (0) target = $region13
    $region12: #{tpu_custom_call.1} parent=1 // pred_region
      %40 = vsyncadd [#allocation7], 0
      %s41 = sshll.u32 %s2, 4
      %s42 = int_to_ptr.hbm [resolvable:$true] %s41
      %s43 = sshll.u32 [#allocation8], 4
      %s44 = int_to_ptr.vmem [resolvable:$true] %s43
      %49 = dma.hbm_to_vmem [thread:$0]  %s42, 512, %s44, [#allocation7], 64, 64, 4
    $region13: #{tpu_custom_call.1} parent=1 // pred_fallthru
      _
    // Predicated region
    $region14: #{tpu_custom_call.1} parent=1 // pred_check
      _
    $region15: #{tpu_custom_call.1} parent=1 // pred_check_branch
      %51 = sbr.rel (0) target = $region17
    $region16: #{tpu_custom_call.1} parent=1 // pred_region
      _
    $region17: #{tpu_custom_call.1} parent=1 // pred_fallthru
      _
    // Predicated region
    $region18: #{tpu_custom_call.1} parent=1 // pred_check
      _
    $region19: #{tpu_custom_call.1} parent=1 // pred_check_branch
      %53 = sbr.rel (0) target = $region21
    $region20: #{tpu_custom_call.1} parent=1 // pred_region
      _
    $region21: #{tpu_custom_call.1} parent=1 // pred_fallthru
      _
    // Predicated region
    $region22: #{tpu_custom_call.1} parent=1 // pred_check
      _
    $region23: #{tpu_custom_call.1} parent=1 // pred_check_branch
      %55 = sbr.rel (0) target = $region25
    $region24: #{tpu_custom_call.1} parent=1 // pred_region
      _
    $region25: #{tpu_custom_call.1} parent=1 // pred_fallthru
      _
    // Predicated region
    $region26: #{tpu_custom_call.1} parent=1 // pred_check
      _
    $region27: #{tpu_custom_call.1} parent=1 // pred_check_branch
      %57 = sbr.rel (0) target = $region29
    $region28: #{tpu_custom_call.1} parent=1 // pred_region
      %59 = dma.done [#allocation4], 128
    $region29: #{tpu_custom_call.1} parent=1 // pred_fallthru
      _
    // Predicated region
    $region30: #{tpu_custom_call.1} parent=1 // pred_check
      _
    $region31: #{tpu_custom_call.1} parent=1 // pred_check_branch
      %61 = sbr.rel (0) target = $region33
    $region32: #{tpu_custom_call.1} parent=1 // pred_region
      %63 = dma.done [#allocation7], 128
    $region33: #{tpu_custom_call.1} parent=1 // pred_fallthru
      _
    // Predicated region
    $region34: #{tpu_custom_call.1} parent=1 // pred_check
      _
    $region35: #{tpu_custom_call.1} parent=1 // pred_check_branch
      %65 = sbr.rel (0) target = $region37
    $region36: #{tpu_custom_call.1} parent=1 // pred_region
      %67 = dma.done [#allocation7], 512
    $region37: #{tpu_custom_call.1} parent=1 // pred_fallthru
      _
    %v69 = vld [vmem:[#allocation3] sm:$0xff]
    %v70 = vld [vmem:[#allocation6] sm:$0xff]
    %72 = vrot.lane.b32.xlu0 %v70, 32
    %v73 = vpop.permute.xlu0 %72
    %vm75 = vcmask 261120
    %v76 = vsel %vm75, %v69, %v73
    %v77 = vpack.c.bf16 %v76, %v76
    %v78 = vld [vmem:[#allocation8] sm:$0xf]
    %v79 = vld [vmem:[#allocation8 + $0x4] sm:$0xf]
    %v80 = vld [vmem:[#allocation8 + $0x8] sm:$0xf]
    %v81 = vld [vmem:[#allocation8 + $0xc] sm:$0xf]
    %v82 = vld [vmem:[#allocation8 + $0x10] sm:$0xf]
    %v83 = vld [vmem:[#allocation8 + $0x14] sm:$0xf]
    %v84 = vld [vmem:[#allocation8 + $0x18] sm:$0xf]
    %v85 = vld [vmem:[#allocation8 + $0x1c] sm:$0xf]
    %v86 = vld [vmem:[%s3] sm:$0x1]
    %v88 = vperm.slane %v86, 0
    %v98 = vunpack.c.l.b16 %v78
    %v99 = vunpack.c.l.b16 %v79
    %v100 = vunpack.c.l.b16 %v80
    %v101 = vunpack.c.l.b16 %v81
    %v102 = vunpack.c.l.b16 %v82
    %v103 = vunpack.c.l.b16 %v83
    %v104 = vunpack.c.l.b16 %v84
    %v105 = vunpack.c.l.b16 %v85
    %v106 = vpack.c.b16 %v99, %v98
    %v107 = vpack.c.b16 %v101, %v100
    %v108 = vpack.c.b16 %v103, %v102
    %v109 = vpack.c.b16 %v105, %v104
    %vm114 = vcmask 523264
    %v116 = vsel %vm114, %v77, 0
    %118 = vmatpush.bf16.msra.mxu0 0
    %119 = vmatpush.bf16.msra.mxu0 0
    %120 = vmatpush.bf16.msra.mxu0 0
    %121 = vmatpush.bf16.msra.mxu0 0
    %122 = vmatpush.bf16.msra.mxu0 %v109
    %123 = vmatpush.bf16.msra.mxu0 %v108
    %124 = vmatpush.bf16.msra.mxu0 %v107
    %125 = vmatpush.bf16.msra.mxu0 %v106
    %126 = vmatmul.bf16.gmra.mxu0 %v116
    %v127 = vpop.f32.mrf.mxu0
    %v128 = vadd.f32 %v88, %v127
    %v129 = vpop.f32.mrf.mxu0
    %130 = vdwg.mxu0
    %v131 = vmax.f32 %v128, 0.0
    %v132 = vld [vmem:[%s4] sm:$0x1]
    %v134 = vperm.slane %v132, 0
    %v136 = vmul.f32 %v131, %v134
    %137 = vadd.xlane.f32.xlu0 %v136
    %v138 = vpop.xlane.xlu0 %137
    %s139 = sld [smem:[#allocation2]]
    %v140 = vstv %s139
    %v141 = vadd.f32 %v138, %v140
    %v143 = vlaneseq
    %v144 = vand.u32 %v143, 127
    %v145 = vperm.slane %v141, %v144
    %vm147 = vcmask 57344
    %148 = vst.msk [vmem:[#allocation9] sm:$0x1] %vm147, %v145
    // Predicated region
    $region38: #{tpu_custom_call.1} parent=1 // pred_check
      _
    $region39: #{tpu_custom_call.1} parent=1 // pred_check_branch
      %150 = sbr.rel (0) target = $region41
    $region40: #{tpu_custom_call.1} parent=1 // pred_region
      %152 = vsyncadd [#allocation5], 0
      %s154 = sshll.u32 [#allocation9], 4
      %s155 = int_to_ptr.vmem [resolvable:$true] %s154
      %s156 = sshll.u32 %s6, 4
      %s157 = int_to_ptr.hbm [resolvable:$true] %s156
      %159 = dma.vmem_to_hbm [thread:$0]  %s155, 16, %s157, [#allocation5]
    $region41: #{tpu_custom_call.1} parent=1 // pred_fallthru
      _
    // Predicated region
    $region42: #{tpu_custom_call.1} parent=1 // pred_check
      _
    $region43: #{tpu_custom_call.1} parent=1 // pred_check_branch
      %161 = sbr.rel (0) target = $region45
    $region44: #{tpu_custom_call.1} parent=1 // pred_region
      %163 = dma.done [#allocation5], 16
    $region45: #{tpu_custom_call.1} parent=1 // pred_fallthru
      _
    %164 = vsyncpa [#allocation4], 1
    %165 = vsyncpa [#allocation7], 1
    %166 = vsyncpa [#allocation5], 1

</llo_original>
